<compile_context>
chip_gen: v5e
topology: v5e:2x2
jax: 0.10.0
libtpu: 0.0.40
codegen_flags: <defaults>
</compile_context>

<pallas_src>
import jax
import jax.numpy as jnp
import numpy as np
from jax import lax
from jax.experimental import pallas as pl
from jax.experimental.pallas import tpu as pltpu

NUM_TAGS = 17          # len(label2id) in the reference module
TPAD = 128             # lane-padded tag dimension
B_BLOCK = 8            # f32 sublane quantum; batch block per grid step
NEG = -1e30            # finite "minus infinity" pad (0 * NEG stays finite, no NaN)


# ------------------------------ fused Pallas kernel --------------------------------------

def ner_crf_kernel(x_ref, w_ref, b_ref, start_ref, end_ref, trans_ref, exp_trans_ref,
                   colmax_ref, tags_ref, mask_ref, last_ref, valid_ref, out_ref, emis_ref):
    """One batch block (B_BLOCK sequences): emission head + CRF (denominator - numerator).

    x_ref        : (S*BB, H)    bf16  hidden states, seq-major (row s*BB+b)
    w_ref        : (H, TPAD)    bf16  zero-padded dense weights
    b_ref        : (1, TPAD)    f32   zero-padded dense bias
    start/end    : (1, TPAD)    f32   NEG-padded CRF start/end transitions
    trans_ref    : (TPAD, TPAD) f32   ZERO-padded transitions (numerator gather)
    exp_trans_ref: (TPAD, TPAD) f32   exp(trans - colmax), zero in padded rows/cols
    colmax_ref   : (1, TPAD)    f32   per-column max of trans (0 in padded lanes)
    tags_ref     : (S*BB, 1)    i32   seq-major tags
    mask_ref     : (S*BB, 1)    f32   seq-major mask (0 for padded batch rows / positions)
    last_ref     : (BB, 1)      i32   tag at last unmasked position
    valid_ref    : (BB, 1)      f32   1 for real batch rows, 0 for padding
    out_ref      : (1, 1)       f32   partial sum of (denominator - numerator) over the block
    emis_ref     : (S*BB, TPAD) f32   VMEM scratch for emission scores
    """
    SB, T = emis_ref.shape
    BB = last_ref.shape[0]
    S = SB // BB

    # ---- emission head: bf16 operands, f32 accumulation; result stays in VMEM -----------
    emis_ref[...] = (jnp.dot(x_ref[...], w_ref[...],
                             preferred_element_type=jnp.float32) + b_ref[...])

    start = start_ref[...]                         # (1, T)
    end = end_ref[...]                             # (1, T)
    mask_all = mask_ref[...]                       # (SB, 1)
    valid = valid_ref[...]                         # (BB, 1)

    def rsum(v):                                   # (R, C) -> (1, 1), lane then sublane reduce
        return jnp.sum(jnp.sum(v, axis=1, keepdims=True), axis=0, keepdims=True)

    # ---- CRF numerator: fully hoisted, vectorized, one MXU gather matmul ------------------
    iota_all = lax.broadcasted_iota(jnp.int32, (SB, T), 1)
    oh_all = (iota_all == tags_ref[...]).astype(jnp.float32)            # (SB, T) one-hots

    # emissions[i, tag_i] * mask_i for all steps (mask[:,0]==1 for real rows, 0 for pad rows)
    emis_num = rsum(oh_all * emis_ref[...] * mask_all)
    # start_transitions[tags[:,0]]
    start_num = rsum(oh_all[:BB, :] * start * mask_all[:BB, :])
    # transitions[tag_{i-1}, tag_i] * mask_i  (steps 1..S-1) via ONE one-hot MXU matmul
    tr_rows = jnp.dot(oh_all[:SB - BB, :], trans_ref[...],
                      preferred_element_type=jnp.float32)               # ((S-1)*BB, T)
    trans_num = rsum(tr_rows * oh_all[BB:, :] * mask_all[BB:, :])
    # end_transitions[last_tags]
    iota_bb = lax.broadcasted_iota(jnp.int32, (BB, T), 1)
    oh_last = (iota_bb == last_ref[...]).astype(jnp.float32)
    end_num = rsum(oh_last * end * valid)
    numerator = emis_num + start_num + trans_num + end_num              # (1, 1)

    # ---- CRF normalizer: alpha recurrence; logsumexp over prev tags as an MXU matmul ------
    #   logsumexp_p(sc_p + trans[p,n]) = m + colmax_n + log( (exp(sc-m) @ exp(trans-colmax))_n )
    exp_trans = exp_trans_ref[...]                                      # padded entries = 0
    colmax = colmax_ref[...]
    sc = start + emis_ref[pl.ds(0, BB), :]                              # (BB, T), pads = NEG

    def step(s, sc):
        row = pl.multiple_of(s * BB, BB)                                # aligned (8,128) tile
        emis_i = emis_ref[pl.ds(row, BB), :]                            # (BB, T)
        m_i = mask_ref[pl.ds(row, BB), :]                               # (BB, 1) gate
        m = jnp.max(sc, axis=1, keepdims=True)
        p = jnp.exp(sc - m)                                             # pads -> 0
        acc = jnp.dot(p, exp_trans, preferred_element_type=jnp.float32)
        nxt = jnp.maximum(m + colmax + jnp.log(acc) + emis_i, jnp.float32(NEG))
        return jnp.where(m_i > 0.0, nxt, sc)

    # TODO(synk): at production S switch to a time-block grid axis instead of full unroll.
    sc = lax.fori_loop(1, S, step, sc, unroll=True)

    sc = sc + end
    m2 = jnp.max(sc, axis=1, keepdims=True)
    denom = m2 + jnp.log(jnp.sum(jnp.exp(sc - m2), axis=1, keepdims=True))   # (BB, 1)
    denom_sum = rsum(denom * valid)

    out_ref[...] = denom_sum - numerator


# ----------------------------------- wrapper ----------------------------------------------

def model_forward(token_ids, labels, params):
    emb, W, b, start, end, trans = params
    B, S = token_ids.shape
    H = emb.shape[1]
    n_blocks = -(-B // B_BLOCK)
    B_pad = n_blocks * B_BLOCK
    T = NUM_TAGS

    # attention_mask = batch_token_ids.gt(0); contiguous-prefix mask with mask[:, 0] all on
    maskf = (token_ids > 0).astype(jnp.float32)

    # TODO(synk): pretrained BERT encoder has no clean in-script equivalent; replaced by a
    #             deterministic embedding lookup producing hidden states (seq-major).
    hidden = emb[token_ids.T]                       # (S, B, H)
    # TODO(synk): nn.Dropout(0.1) is identity in eval mode; train-mode dropout not modeled.

    def to_blocks(x, fill=0):
        # (S, B, ...) -> (n_blocks * S * B_BLOCK, ...)  batch padded to the sublane quantum
        pad_width = [(0, 0), (0, B_pad - B)] + [(0, 0)] * (x.ndim - 2)
        xp = jnp.pad(x, pad_width, constant_values=fill)
        xp = xp.reshape((S, n_blocks, B_BLOCK) + x.shape[2:])
        xp = jnp.moveaxis(xp, 1, 0)                 # (n_blocks, S, B_BLOCK, ...)
        return xp.reshape((n_blocks * S * B_BLOCK,) + x.shape[2:])

    x_sb = to_blocks(hidden).astype(jnp.bfloat16)                       # (rows, H)
    tags_sb = to_blocks(labels.T.astype(jnp.int32))[:, None]            # (rows, 1)
    mask_sb = to_blocks(maskf.T)[:, None]                               # (rows, 1)

    seq_ends = jnp.sum(maskf, axis=1).astype(jnp.int32) - 1
    last_tag = labels[jnp.arange(B), seq_ends].astype(jnp.int32)
    last_tag = jnp.pad(last_tag, (0, B_pad - B)).reshape(B_pad, 1)
    batch_valid = jnp.pad(jnp.ones((B,), jnp.float32), (0, B_pad - B)).reshape(B_pad, 1)

    # lane-pad parameters: zeros for the dense head, finite NEG for CRF start/end,
    # zero-padded trans for the numerator gather, column-max-shifted exp(trans) for the alpha
    w_pad = jnp.zeros((H, TPAD), jnp.float32).at[:, :T].set(W).astype(jnp.bfloat16)
    b_pad = jnp.zeros((1, TPAD), jnp.float32).at[0, :T].set(b)
    start_pad = jnp.full((1, TPAD), NEG, jnp.float32).at[0, :T].set(start)
    end_pad = jnp.full((1, TPAD), NEG, jnp.float32).at[0, :T].set(end)
    trans_zpad = jnp.zeros((TPAD, TPAD), jnp.float32).at[:T, :T].set(trans)
    colmax = jnp.max(trans, axis=0)                                     # (T,)
    colmax_pad = jnp.zeros((1, TPAD), jnp.float32).at[0, :T].set(colmax)
    exp_trans = jnp.zeros((TPAD, TPAD), jnp.float32).at[:T, :T].set(
        jnp.exp(trans - colmax[None, :]))

    SB = S * B_BLOCK
    flops = n_blocks * (2 * SB * H * TPAD                    # emission head
                        + 2 * (SB - B_BLOCK) * TPAD * TPAD   # numerator trans gather
                        + 2 * (S - 1) * B_BLOCK * TPAD * TPAD)  # alpha matmuls
    ce = pl.CostEstimate(
        flops=int(flops),
        transcendentals=int(n_blocks * 2 * SB * TPAD),
        bytes_accessed=int(x_sb.size * 2 + tags_sb.size * 4 + mask_sb.size * 4
                           + (3 * TPAD * TPAD + 4 * TPAD) * 4 + H * TPAD * 2))

    partial = pl.pallas_call(
        ner_crf_kernel,
        out_shape=jax.ShapeDtypeStruct((n_blocks, 1), jnp.float32),
        grid=(n_blocks,),
        in_specs=[
            pl.BlockSpec((SB, H), lambda i: (i, 0)),           # x (streamed per batch block)
            pl.BlockSpec((H, TPAD), lambda i: (0, 0)),         # W
            pl.BlockSpec((1, TPAD), lambda i: (0, 0)),         # b
            pl.BlockSpec((1, TPAD), lambda i: (0, 0)),         # start
            pl.BlockSpec((1, TPAD), lambda i: (0, 0)),         # end
            pl.BlockSpec((TPAD, TPAD), lambda i: (0, 0)),      # trans (zero-padded)
            pl.BlockSpec((TPAD, TPAD), lambda i: (0, 0)),      # exp(trans - colmax)
            pl.BlockSpec((1, TPAD), lambda i: (0, 0)),         # colmax
            pl.BlockSpec((SB, 1), lambda i: (i, 0)),           # tags
            pl.BlockSpec((SB, 1), lambda i: (i, 0)),           # mask
            pl.BlockSpec((B_BLOCK, 1), lambda i: (i, 0)),      # last tag
            pl.BlockSpec((B_BLOCK, 1), lambda i: (i, 0)),      # batch-valid
        ],
        out_specs=pl.BlockSpec((1, 1), lambda i: (i, 0)),
        scratch_shapes=[pltpu.VMEM((SB, TPAD), jnp.float32)],
        compiler_params=pltpu.CompilerParams(
            dimension_semantics=("parallel",),                 # batch blocks -> v7x 2 TCs
            vmem_limit_bytes=32 * 1024 * 1024),                # safe on all gens (<= v7x 64MiB)
        cost_estimate=ce,
    )(x_sb, w_pad, b_pad, start_pad, end_pad, trans_zpad, exp_trans, colmax_pad,
      tags_sb, mask_sb, last_tag, batch_valid)

    return jnp.sum(partial) / B                                # CRF reduction='mean'


# ------------------------------- pure-JAX reference ---------------------------------------

def crf_loss_ref(emissions, maskf, tags, start, end, trans):
    B, S, T = emissions.shape
    ar = jnp.arange(B)
    score = start[tags[:, 0]] + emissions[ar, 0, tags[:, 0]]
    for i in range(1, S):
        score = score + trans[tags[:, i - 1], tags[:, i]] * maskf[:, i]
        score = score + emissions[ar, i, tags[:, i]] * maskf[:, i]
    seq_ends = maskf.sum(axis=1).astype(jnp.int32) - 1
    last_tags = tags[ar, seq_ends]
    num = score + end[last_tags]

    sc = start[None, :] + emissions[:, 0]
    for i in range(1, S):
        brd = sc[:, :, None] + trans[None, :, :] + emissions[:, i][:, None, :]
        m = brd.max(axis=1)
        nxt = m + jnp.log(jnp.exp(brd - m[:, None, :]).sum(axis=1))
        sc = jnp.where(maskf[:, i:i + 1] > 0, nxt, sc)
    sc = sc + end[None, :]
    m2 = sc.max(axis=1, keepdims=True)
    denom = (m2 + jnp.log(jnp.exp(sc - m2).sum(axis=1, keepdims=True)))[:, 0]
    return jnp.mean(denom - num)


# --------------------------------------- main ---------------------------------------------

if __name__ == "__main__":
    key = jax.random.PRNGKey(0)
    B, S, H, VOCAB = 2, 8, 32, 50
    k = jax.random.split(key, 8)

    lengths = jnp.array([8, 5], dtype=jnp.int32)
    ids = jax.random.randint(k[0], (B, S), 1, VOCAB, dtype=jnp.int32)
    pos = jnp.arange(S)[None, :]
    token_ids = jnp.where(pos < lengths[:, None], ids, 0)   # padded ids -> prefix mask
    labels_ = jax.random.randint(k[1], (B, S), 0, NUM_TAGS, dtype=jnp.int32)

    # deterministic parameter init (mirrors nn.Linear / CRF uniform inits)
    emb = 0.02 * jax.random.normal(k[2], (VOCAB, H), dtype=jnp.float32)
    bound = 1.0 / float(np.sqrt(H))
    W = jax.random.uniform(k[3], (H, NUM_TAGS), minval=-bound, maxval=bound, dtype=jnp.float32)
    b = jax.random.uniform(k[4], (NUM_TAGS,), minval=-bound, maxval=bound, dtype=jnp.float32)
    start = jax.random.uniform(k[5], (NUM_TAGS,), minval=-0.1, maxval=0.1, dtype=jnp.float32)
    end = jax.random.uniform(k[6], (NUM_TAGS,), minval=-0.1, maxval=0.1, dtype=jnp.float32)
    trans = jax.random.uniform(k[7], (NUM_TAGS, NUM_TAGS), minval=-0.1, maxval=0.1,
                               dtype=jnp.float32)

    params = (emb, W, b, start, end, trans)
    loss = jax.jit(model_forward)(token_ids, labels_, params)
    loss = jax.block_until_ready(loss)

    # verify against a pure-JAX reference of the same forward pass
    maskf = (token_ids > 0).astype(jnp.float32)
    hidden = emb[token_ids]
    emissions_ref = (hidden.reshape(B * S, H) @ W + b).reshape(B, S, NUM_TAGS)
    ref = crf_loss_ref(emissions_ref, maskf, labels_, start, end, trans)

    np.testing.assert_allclose(np.array(loss), np.array(ref), rtol=2e-3, atol=2e-3)
    print("KERNEL_OK")
</pallas_src>

<mosaic_0001>
module attributes {stable_mosaic.version = 11 : i64} {
  func.func @ner_crf_kernel(%arg0: i32, %arg1: memref<64x32xbf16, #tpu.memory_space<vmem>>, %arg2: memref<32x128xbf16, #tpu.memory_space<vmem>>, %arg3: memref<1x128xf32, #tpu.memory_space<vmem>>, %arg4: memref<1x128xf32, #tpu.memory_space<vmem>>, %arg5: memref<1x128xf32, #tpu.memory_space<vmem>>, %arg6: memref<128x128xf32, #tpu.memory_space<vmem>>, %arg7: memref<128x128xf32, #tpu.memory_space<vmem>>, %arg8: memref<1x128xf32, #tpu.memory_space<vmem>>, %arg9: memref<64x1xi32, #tpu.memory_space<vmem>>, %arg10: memref<64x1xf32, #tpu.memory_space<vmem>>, %arg11: memref<8x1xi32, #tpu.memory_space<vmem>>, %arg12: memref<8x1xf32, #tpu.memory_space<vmem>>, %arg13: memref<1x1xf32, #tpu.memory_space<vmem>>, %arg14: memref<64x128xf32, #tpu.memory_space<vmem>>) attributes {dimension_semantics = [#tpu.dimension_semantics<parallel>], iteration_bounds = array<i64: 1>, scalar_prefetch = 0 : i64, scratch_operands = 1 : i64, tpu.core_type = #tpu.core_type<tc>, window_params = [{transform_indices = @transform_0, window_bounds = array<i64: 64, 32>}, {pipeline_mode = #tpu.pipeline_mode<synchronous>, transform_indices = @transform_1, window_bounds = array<i64: 32, 128>}, {pipeline_mode = #tpu.pipeline_mode<synchronous>, transform_indices = @transform_2, window_bounds = array<i64: 1, 128>}, {pipeline_mode = #tpu.pipeline_mode<synchronous>, transform_indices = @transform_3, window_bounds = array<i64: 1, 128>}, {pipeline_mode = #tpu.pipeline_mode<synchronous>, transform_indices = @transform_4, window_bounds = array<i64: 1, 128>}, {pipeline_mode = #tpu.pipeline_mode<synchronous>, transform_indices = @transform_5, window_bounds = array<i64: 128, 128>}, {pipeline_mode = #tpu.pipeline_mode<synchronous>, transform_indices = @transform_6, window_bounds = array<i64: 128, 128>}, {pipeline_mode = #tpu.pipeline_mode<synchronous>, transform_indices = @transform_7, window_bounds = array<i64: 1, 128>}, {transform_indices = @transform_8, window_bounds = array<i64: 64, 1>}, {transform_indices = @transform_9, window_bounds = array<i64: 64, 1>}, {transform_indices = @transform_10, window_bounds = array<i64: 8, 1>}, {transform_indices = @transform_11, window_bounds = array<i64: 8, 1>}, {transform_indices = @transform_12, window_bounds = array<i64: 1, 1>}]} {
    %c0 = arith.constant 0 : index
    %c0_0 = arith.constant 0 : index
    %0 = vector.load %arg1[%c0, %c0_0] : memref<64x32xbf16, #tpu.memory_space<vmem>>, vector<64x32xbf16>
    %c0_1 = arith.constant 0 : index
    %c0_2 = arith.constant 0 : index
    %1 = vector.load %arg2[%c0_1, %c0_2] : memref<32x128xbf16, #tpu.memory_space<vmem>>, vector<32x128xbf16>
    %cst = arith.constant dense<0.000000e+00> : vector<64x128xf32>
    %2 = tpu.matmul %0, %1, %cst {dimension_numbers = #tpu.dot_dimension_numbers<[1], [0], [0], [1], [0, 0, 1, 1], [], []>} : vector<64x32xbf16>, vector<32x128xbf16>, vector<64x128xf32> -> vector<64x128xf32>
    %c0_3 = arith.constant 0 : index
    %c0_4 = arith.constant 0 : index
    %3 = vector.load %arg3[%c0_3, %c0_4] : memref<1x128xf32, #tpu.memory_space<vmem>>, vector<1x128xf32>
    %4 = vector.broadcast %3 : vector<1x128xf32> to vector<64x128xf32>
    %5 = arith.addf %2, %4 : vector<64x128xf32>
    %c0_5 = arith.constant 0 : index
    %c0_6 = arith.constant 0 : index
    %6 = vector.load %arg14[%c0_5, %c0_6] : memref<64x128xf32, #tpu.memory_space<vmem>>, vector<64x128xf32>
    tpu.vector_store %arg14[%c0_5, %c0_6], %5 {strides = array<i32>} : memref<64x128xf32, #tpu.memory_space<vmem>>, vector<64x128xf32>,
    %c0_7 = arith.constant 0 : index
    %c0_8 = arith.constant 0 : index
    %7 = vector.load %arg4[%c0_7, %c0_8] : memref<1x128xf32, #tpu.memory_space<vmem>>, vector<1x128xf32>
    %c0_9 = arith.constant 0 : index
    %c0_10 = arith.constant 0 : index
    %8 = vector.load %arg5[%c0_9, %c0_10] : memref<1x128xf32, #tpu.memory_space<vmem>>, vector<1x128xf32>
    %c0_11 = arith.constant 0 : index
    %c0_12 = arith.constant 0 : index
    %9 = vector.load %arg10[%c0_11, %c0_12] : memref<64x1xf32, #tpu.memory_space<vmem>>, vector<64x1xf32>
    %c0_13 = arith.constant 0 : index
    %c0_14 = arith.constant 0 : index
    %10 = vector.load %arg12[%c0_13, %c0_14] : memref<8x1xf32, #tpu.memory_space<vmem>>, vector<8x1xf32>
    %11 = tpu.iota {dimensions = array<i32: 1>} : vector<64x128xi32>
    %c0_15 = arith.constant 0 : index
    %c0_16 = arith.constant 0 : index
    %12 = vector.load %arg9[%c0_15, %c0_16] : memref<64x1xi32, #tpu.memory_space<vmem>>, vector<64x1xi32>
    %13 = vector.broadcast %12 : vector<64x1xi32> to vector<64x128xi32>
    %14 = arith.cmpi eq, %11, %13 : vector<64x128xi32>
    %15 = arith.extui %14 : vector<64x128xi1> to vector<64x128xi32>
    %16 = arith.sitofp %15 : vector<64x128xi32> to vector<64x128xf32>
    %c0_17 = arith.constant 0 : index
    %c0_18 = arith.constant 0 : index
    %17 = vector.load %arg14[%c0_17, %c0_18] : memref<64x128xf32, #tpu.memory_space<vmem>>, vector<64x128xf32>
    %18 = arith.mulf %16, %17 : vector<64x128xf32>
    %19 = vector.broadcast %9 : vector<64x1xf32> to vector<64x128xf32>
    %20 = arith.mulf %18, %19 : vector<64x128xf32>
    %cst_19 = arith.constant dense<0.000000e+00> : vector<64xf32>
    %21 = vector.multi_reduction <add>, %20, %cst_19 [1] : vector<64x128xf32> to vector<64xf32>
    %22 = vector.shape_cast %21 : vector<64xf32> to vector<64x1xf32>
    %cst_20 = arith.constant dense<0.000000e+00> : vector<1xf32>
    %23 = vector.multi_reduction <add>, %22, %cst_20 [0] : vector<64x1xf32> to vector<1xf32>
    %24 = vector.shape_cast %23 : vector<1xf32> to vector<1x1xf32>
    %25 = vector.extract_strided_slice %16 {offsets = [0, 0], sizes = [8, 128], strides = [1, 1]} : vector<64x128xf32> to vector<8x128xf32>
    %26 = vector.broadcast %7 : vector<1x128xf32> to vector<8x128xf32>
    %27 = arith.mulf %25, %26 : vector<8x128xf32>
    %28 = vector.extract_strided_slice %9 {offsets = [0, 0], sizes = [8, 1], strides = [1, 1]} : vector<64x1xf32> to vector<8x1xf32>
    %29 = vector.broadcast %28 : vector<8x1xf32> to vector<8x128xf32>
    %30 = arith.mulf %27, %29 : vector<8x128xf32>
    %cst_21 = arith.constant dense<0.000000e+00> : vector<8xf32>
    %31 = vector.multi_reduction <add>, %30, %cst_21 [1] : vector<8x128xf32> to vector<8xf32>
    %32 = vector.shape_cast %31 : vector<8xf32> to vector<8x1xf32>
    %cst_22 = arith.constant dense<0.000000e+00> : vector<1xf32>
    %33 = vector.multi_reduction <add>, %32, %cst_22 [0] : vector<8x1xf32> to vector<1xf32>
    %34 = vector.shape_cast %33 : vector<1xf32> to vector<1x1xf32>
    %35 = vector.extract_strided_slice %16 {offsets = [0, 0], sizes = [56, 128], strides = [1, 1]} : vector<64x128xf32> to vector<56x128xf32>
    %c0_23 = arith.constant 0 : index
    %c0_24 = arith.constant 0 : index
    %36 = vector.load %arg6[%c0_23, %c0_24] : memref<128x128xf32, #tpu.memory_space<vmem>>, vector<128x128xf32>
    %cst_25 = arith.constant dense<0.000000e+00> : vector<56x128xf32>
    %37 = tpu.matmul %35, %36, %cst_25 {dimension_numbers = #tpu.dot_dimension_numbers<[1], [0], [0], [1], [0, 0, 1, 1], [], []>} : vector<56x128xf32>, vector<128x128xf32>, vector<56x128xf32> -> vector<56x128xf32>
    %38 = vector.extract_strided_slice %16 {offsets = [8, 0], sizes = [56, 128], strides = [1, 1]} : vector<64x128xf32> to vector<56x128xf32>
    %39 = arith.mulf %37, %38 : vector<56x128xf32>
    %40 = vector.extract_strided_slice %9 {offsets = [8, 0], sizes = [56, 1], strides = [1, 1]} : vector<64x1xf32> to vector<56x1xf32>
    %41 = vector.broadcast %40 : vector<56x1xf32> to vector<56x128xf32>
    %42 = arith.mulf %39, %41 : vector<56x128xf32>
    %cst_26 = arith.constant dense<0.000000e+00> : vector<56xf32>
    %43 = vector.multi_reduction <add>, %42, %cst_26 [1] : vector<56x128xf32> to vector<56xf32>
    %44 = vector.shape_cast %43 : vector<56xf32> to vector<56x1xf32>
    %cst_27 = arith.constant dense<0.000000e+00> : vector<1xf32>
    %45 = vector.multi_reduction <add>, %44, %cst_27 [0] : vector<56x1xf32> to vector<1xf32>
    %46 = vector.shape_cast %45 : vector<1xf32> to vector<1x1xf32>
    %47 = tpu.iota {dimensions = array<i32: 1>} : vector<8x128xi32>
    %c0_28 = arith.constant 0 : index
    %c0_29 = arith.constant 0 : index
    %48 = vector.load %arg11[%c0_28, %c0_29] : memref<8x1xi32, #tpu.memory_space<vmem>>, vector<8x1xi32>
    %49 = vector.broadcast %48 : vector<8x1xi32> to vector<8x128xi32>
    %50 = arith.cmpi eq, %47, %49 : vector<8x128xi32>
    %51 = arith.extui %50 : vector<8x128xi1> to vector<8x128xi32>
    %52 = arith.sitofp %51 : vector<8x128xi32> to vector<8x128xf32>
    %53 = vector.broadcast %8 : vector<1x128xf32> to vector<8x128xf32>
    %54 = arith.mulf %52, %53 : vector<8x128xf32>
    %55 = vector.broadcast %10 : vector<8x1xf32> to vector<8x128xf32>
    %56 = arith.mulf %54, %55 : vector<8x128xf32>
    %cst_30 = arith.constant dense<0.000000e+00> : vector<8xf32>
    %57 = vector.multi_reduction <add>, %56, %cst_30 [1] : vector<8x128xf32> to vector<8xf32>
    %58 = vector.shape_cast %57 : vector<8xf32> to vector<8x1xf32>
    %cst_31 = arith.constant dense<0.000000e+00> : vector<1xf32>
    %59 = vector.multi_reduction <add>, %58, %cst_31 [0] : vector<8x1xf32> to vector<1xf32>
    %60 = vector.shape_cast %59 : vector<1xf32> to vector<1x1xf32>
    %61 = arith.addf %24, %34 : vector<1x1xf32>
    %62 = arith.addf %61, %46 : vector<1x1xf32>
    %63 = arith.addf %62, %60 : vector<1x1xf32>
    %c0_32 = arith.constant 0 : index
    %c0_33 = arith.constant 0 : index
    %64 = vector.load %arg7[%c0_32, %c0_33] : memref<128x128xf32, #tpu.memory_space<vmem>>, vector<128x128xf32>
    %c0_34 = arith.constant 0 : index
    %c0_35 = arith.constant 0 : index
    %65 = vector.load %arg8[%c0_34, %c0_35] : memref<1x128xf32, #tpu.memory_space<vmem>>, vector<1x128xf32>
    %c0_36 = arith.constant 0 : index
    %c0_37 = arith.constant 0 : index
    %66 = vector.load %arg14[%c0_36, %c0_37] : memref<64x128xf32, #tpu.memory_space<vmem>>, vector<8x128xf32>
    %67 = vector.broadcast %7 : vector<1x128xf32> to vector<8x128xf32>
    %68 = arith.addf %67, %66 : vector<8x128xf32>
    %c1_i32 = arith.constant 1 : i32
    %c8_i32 = arith.constant 8 : i32
    %69 = arith.muli %c1_i32, %c8_i32 : i32
    %70 = tpu.assume_multiple %69, 8 : i32
    %71 = arith.index_cast %70 : i32 to index
    %c0_38 = arith.constant 0 : index
    %72 = vector.load %arg14[%71, %c0_38] : memref<64x128xf32, #tpu.memory_space<vmem>>, vector<8x128xf32>
    %73 = arith.index_cast %70 : i32 to index
    %c0_39 = arith.constant 0 : index
    %74 = vector.load %arg10[%73, %c0_39] : memref<64x1xf32, #tpu.memory_space<vmem>>, vector<8x1xf32>
    %cst_40 = arith.constant dense<0xFF800000> : vector<8xf32>
    %75 = vector.multi_reduction <maximumf>, %68, %cst_40 [1] : vector<8x128xf32> to vector<8xf32>
    %76 = vector.shape_cast %75 : vector<8xf32> to vector<8x1xf32>
    %77 = vector.broadcast %76 : vector<8x1xf32> to vector<8x128xf32>
    %78 = arith.subf %68, %77 : vector<8x128xf32>
    %79 = math.exp %78 : vector<8x128xf32>
    %cst_41 = arith.constant dense<0.000000e+00> : vector<8x128xf32>
    %80 = tpu.matmul %79, %64, %cst_41 {dimension_numbers = #tpu.dot_dimension_numbers<[1], [0], [0], [1], [0, 0, 1, 1], [], []>} : vector<8x128xf32>, vector<128x128xf32>, vector<8x128xf32> -> vector<8x128xf32>
    %81 = vector.broadcast %76 : vector<8x1xf32> to vector<8x128xf32>
    %82 = vector.broadcast %65 : vector<1x128xf32> to vector<8x128xf32>
    %83 = arith.addf %81, %82 : vector<8x128xf32>
    %84 = math.log %80 : vector<8x128xf32>
    %85 = arith.addf %83, %84 : vector<8x128xf32>
    %86 = arith.addf %85, %72 : vector<8x128xf32>
    %cst_42 = arith.constant -1.000000e+30 : f32
    %87 = vector.broadcast %cst_42 : f32 to vector<8x128xf32>
    %88 = arith.maximumf %86, %87 : vector<8x128xf32>
    %cst_43 = arith.constant 0.000000e+00 : f32
    %89 = vector.broadcast %cst_43 : f32 to vector<8x1xf32>
    %90 = arith.cmpf ogt, %74, %89 : vector<8x1xf32>
    %91 = vector.shape_cast %90 : vector<8x1xi1> to vector<8x1xi1>
    %92 = vector.broadcast %91 : vector<8x1xi1> to vector<8x128xi1>
    %93 = arith.select %92, %88, %68 : vector<8x128xi1>, vector<8x128xf32>
    %c2_i32 = arith.constant 2 : i32
    %c8_i32_44 = arith.constant 8 : i32
    %94 = arith.muli %c2_i32, %c8_i32_44 : i32
    %95 = tpu.assume_multiple %94, 8 : i32
    %96 = arith.index_cast %95 : i32 to index
    %c0_45 = arith.constant 0 : index
    %97 = vector.load %arg14[%96, %c0_45] : memref<64x128xf32, #tpu.memory_space<vmem>>, vector<8x128xf32>
    %98 = arith.index_cast %95 : i32 to index
    %c0_46 = arith.constant 0 : index
    %99 = vector.load %arg10[%98, %c0_46] : memref<64x1xf32, #tpu.memory_space<vmem>>, vector<8x1xf32>
    %cst_47 = arith.constant dense<0xFF800000> : vector<8xf32>
    %100 = vector.multi_reduction <maximumf>, %93, %cst_47 [1] : vector<8x128xf32> to vector<8xf32>
    %101 = vector.shape_cast %100 : vector<8xf32> to vector<8x1xf32>
    %102 = vector.broadcast %101 : vector<8x1xf32> to vector<8x128xf32>
    %103 = arith.subf %93, %102 : vector<8x128xf32>
    %104 = math.exp %103 : vector<8x128xf32>
    %cst_48 = arith.constant dense<0.000000e+00> : vector<8x128xf32>
    %105 = tpu.matmul %104, %64, %cst_48 {dimension_numbers = #tpu.dot_dimension_numbers<[1], [0], [0], [1], [0, 0, 1, 1], [], []>} : vector<8x128xf32>, vector<128x128xf32>, vector<8x128xf32> -> vector<8x128xf32>
    %106 = vector.broadcast %101 : vector<8x1xf32> to vector<8x128xf32>
    %107 = vector.broadcast %65 : vector<1x128xf32> to vector<8x128xf32>
    %108 = arith.addf %106, %107 : vector<8x128xf32>
    %109 = math.log %105 : vector<8x128xf32>
    %110 = arith.addf %108, %109 : vector<8x128xf32>
    %111 = arith.addf %110, %97 : vector<8x128xf32>
    %cst_49 = arith.constant -1.000000e+30 : f32
    %112 = vector.broadcast %cst_49 : f32 to vector<8x128xf32>
    %113 = arith.maximumf %111, %112 : vector<8x128xf32>
    %cst_50 = arith.constant 0.000000e+00 : f32
    %114 = vector.broadcast %cst_50 : f32 to vector<8x1xf32>
    %115 = arith.cmpf ogt, %99, %114 : vector<8x1xf32>
    %116 = vector.shape_cast %115 : vector<8x1xi1> to vector<8x1xi1>
    %117 = vector.broadcast %116 : vector<8x1xi1> to vector<8x128xi1>
    %118 = arith.select %117, %113, %93 : vector<8x128xi1>, vector<8x128xf32>
    %c3_i32 = arith.constant 3 : i32
    %c8_i32_51 = arith.constant 8 : i32
    %119 = arith.muli %c3_i32, %c8_i32_51 : i32
    %120 = tpu.assume_multiple %119, 8 : i32
    %121 = arith.index_cast %120 : i32 to index
    %c0_52 = arith.constant 0 : index
    %122 = vector.load %arg14[%121, %c0_52] : memref<64x128xf32, #tpu.memory_space<vmem>>, vector<8x128xf32>
    %123 = arith.index_cast %120 : i32 to index
    %c0_53 = arith.constant 0 : index
    %124 = vector.load %arg10[%123, %c0_53] : memref<64x1xf32, #tpu.memory_space<vmem>>, vector<8x1xf32>
    %cst_54 = arith.constant dense<0xFF800000> : vector<8xf32>
    %125 = vector.multi_reduction <maximumf>, %118, %cst_54 [1] : vector<8x128xf32> to vector<8xf32>
    %126 = vector.shape_cast %125 : vector<8xf32> to vector<8x1xf32>
    %127 = vector.broadcast %126 : vector<8x1xf32> to vector<8x128xf32>
    %128 = arith.subf %118, %127 : vector<8x128xf32>
    %129 = math.exp %128 : vector<8x128xf32>
    %cst_55 = arith.constant dense<0.000000e+00> : vector<8x128xf32>
    %130 = tpu.matmul %129, %64, %cst_55 {dimension_numbers = #tpu.dot_dimension_numbers<[1], [0], [0], [1], [0, 0, 1, 1], [], []>} : vector<8x128xf32>, vector<128x128xf32>, vector<8x128xf32> -> vector<8x128xf32>
    %131 = vector.broadcast %126 : vector<8x1xf32> to vector<8x128xf32>
    %132 = vector.broadcast %65 : vector<1x128xf32> to vector<8x128xf32>
    %133 = arith.addf %131, %132 : vector<8x128xf32>
    %134 = math.log %130 : vector<8x128xf32>
    %135 = arith.addf %133, %134 : vector<8x128xf32>
    %136 = arith.addf %135, %122 : vector<8x128xf32>
    %cst_56 = arith.constant -1.000000e+30 : f32
    %137 = vector.broadcast %cst_56 : f32 to vector<8x128xf32>
    %138 = arith.maximumf %136, %137 : vector<8x128xf32>
    %cst_57 = arith.constant 0.000000e+00 : f32
    %139 = vector.broadcast %cst_57 : f32 to vector<8x1xf32>
    %140 = arith.cmpf ogt, %124, %139 : vector<8x1xf32>
    %141 = vector.shape_cast %140 : vector<8x1xi1> to vector<8x1xi1>
    %142 = vector.broadcast %141 : vector<8x1xi1> to vector<8x128xi1>
    %143 = arith.select %142, %138, %118 : vector<8x128xi1>, vector<8x128xf32>
    %c4_i32 = arith.constant 4 : i32
    %c8_i32_58 = arith.constant 8 : i32
    %144 = arith.muli %c4_i32, %c8_i32_58 : i32
    %145 = tpu.assume_multiple %144, 8 : i32
    %146 = arith.index_cast %145 : i32 to index
    %c0_59 = arith.constant 0 : index
    %147 = vector.load %arg14[%146, %c0_59] : memref<64x128xf32, #tpu.memory_space<vmem>>, vector<8x128xf32>
    %148 = arith.index_cast %145 : i32 to index
    %c0_60 = arith.constant 0 : index
    %149 = vector.load %arg10[%148, %c0_60] : memref<64x1xf32, #tpu.memory_space<vmem>>, vector<8x1xf32>
    %cst_61 = arith.constant dense<0xFF800000> : vector<8xf32>
    %150 = vector.multi_reduction <maximumf>, %143, %cst_61 [1] : vector<8x128xf32> to vector<8xf32>
    %151 = vector.shape_cast %150 : vector<8xf32> to vector<8x1xf32>
    %152 = vector.broadcast %151 : vector<8x1xf32> to vector<8x128xf32>
    %153 = arith.subf %143, %152 : vector<8x128xf32>
    %154 = math.exp %153 : vector<8x128xf32>
    %cst_62 = arith.constant dense<0.000000e+00> : vector<8x128xf32>
    %155 = tpu.matmul %154, %64, %cst_62 {dimension_numbers = #tpu.dot_dimension_numbers<[1], [0], [0], [1], [0, 0, 1, 1], [], []>} : vector<8x128xf32>, vector<128x128xf32>, vector<8x128xf32> -> vector<8x128xf32>
    %156 = vector.broadcast %151 : vector<8x1xf32> to vector<8x128xf32>
    %157 = vector.broadcast %65 : vector<1x128xf32> to vector<8x128xf32>
    %158 = arith.addf %156, %157 : vector<8x128xf32>
    %159 = math.log %155 : vector<8x128xf32>
    %160 = arith.addf %158, %159 : vector<8x128xf32>
    %161 = arith.addf %160, %147 : vector<8x128xf32>
    %cst_63 = arith.constant -1.000000e+30 : f32
    %162 = vector.broadcast %cst_63 : f32 to vector<8x128xf32>
    %163 = arith.maximumf %161, %162 : vector<8x128xf32>
    %cst_64 = arith.constant 0.000000e+00 : f32
    %164 = vector.broadcast %cst_64 : f32 to vector<8x1xf32>
    %165 = arith.cmpf ogt, %149, %164 : vector<8x1xf32>
    %166 = vector.shape_cast %165 : vector<8x1xi1> to vector<8x1xi1>
    %167 = vector.broadcast %166 : vector<8x1xi1> to vector<8x128xi1>
    %168 = arith.select %167, %163, %143 : vector<8x128xi1>, vector<8x128xf32>
    %c5_i32 = arith.constant 5 : i32
    %c8_i32_65 = arith.constant 8 : i32
    %169 = arith.muli %c5_i32, %c8_i32_65 : i32
    %170 = tpu.assume_multiple %169, 8 : i32
    %171 = arith.index_cast %170 : i32 to index
    %c0_66 = arith.constant 0 : index
    %172 = vector.load %arg14[%171, %c0_66] : memref<64x128xf32, #tpu.memory_space<vmem>>, vector<8x128xf32>
    %173 = arith.index_cast %170 : i32 to index
    %c0_67 = arith.constant 0 : index
    %174 = vector.load %arg10[%173, %c0_67] : memref<64x1xf32, #tpu.memory_space<vmem>>, vector<8x1xf32>
    %cst_68 = arith.constant dense<0xFF800000> : vector<8xf32>
    %175 = vector.multi_reduction <maximumf>, %168, %cst_68 [1] : vector<8x128xf32> to vector<8xf32>
    %176 = vector.shape_cast %175 : vector<8xf32> to vector<8x1xf32>
    %177 = vector.broadcast %176 : vector<8x1xf32> to vector<8x128xf32>
    %178 = arith.subf %168, %177 : vector<8x128xf32>
    %179 = math.exp %178 : vector<8x128xf32>
    %cst_69 = arith.constant dense<0.000000e+00> : vector<8x128xf32>
    %180 = tpu.matmul %179, %64, %cst_69 {dimension_numbers = #tpu.dot_dimension_numbers<[1], [0], [0], [1], [0, 0, 1, 1], [], []>} : vector<8x128xf32>, vector<128x128xf32>, vector<8x128xf32> -> vector<8x128xf32>
    %181 = vector.broadcast %176 : vector<8x1xf32> to vector<8x128xf32>
    %182 = vector.broadcast %65 : vector<1x128xf32> to vector<8x128xf32>
    %183 = arith.addf %181, %182 : vector<8x128xf32>
    %184 = math.log %180 : vector<8x128xf32>
    %185 = arith.addf %183, %184 : vector<8x128xf32>
    %186 = arith.addf %185, %172 : vector<8x128xf32>
    %cst_70 = arith.constant -1.000000e+30 : f32
    %187 = vector.broadcast %cst_70 : f32 to vector<8x128xf32>
    %188 = arith.maximumf %186, %187 : vector<8x128xf32>
    %cst_71 = arith.constant 0.000000e+00 : f32
    %189 = vector.broadcast %cst_71 : f32 to vector<8x1xf32>
    %190 = arith.cmpf ogt, %174, %189 : vector<8x1xf32>
    %191 = vector.shape_cast %190 : vector<8x1xi1> to vector<8x1xi1>
    %192 = vector.broadcast %191 : vector<8x1xi1> to vector<8x128xi1>
    %193 = arith.select %192, %188, %168 : vector<8x128xi1>, vector<8x128xf32>
    %c6_i32 = arith.constant 6 : i32
    %c8_i32_72 = arith.constant 8 : i32
    %194 = arith.muli %c6_i32, %c8_i32_72 : i32
    %195 = tpu.assume_multiple %194, 8 : i32
    %196 = arith.index_cast %195 : i32 to index
    %c0_73 = arith.constant 0 : index
    %197 = vector.load %arg14[%196, %c0_73] : memref<64x128xf32, #tpu.memory_space<vmem>>, vector<8x128xf32>
    %198 = arith.index_cast %195 : i32 to index
    %c0_74 = arith.constant 0 : index
    %199 = vector.load %arg10[%198, %c0_74] : memref<64x1xf32, #tpu.memory_space<vmem>>, vector<8x1xf32>
    %cst_75 = arith.constant dense<0xFF800000> : vector<8xf32>
    %200 = vector.multi_reduction <maximumf>, %193, %cst_75 [1] : vector<8x128xf32> to vector<8xf32>
    %201 = vector.shape_cast %200 : vector<8xf32> to vector<8x1xf32>
    %202 = vector.broadcast %201 : vector<8x1xf32> to vector<8x128xf32>
    %203 = arith.subf %193, %202 : vector<8x128xf32>
    %204 = math.exp %203 : vector<8x128xf32>
    %cst_76 = arith.constant dense<0.000000e+00> : vector<8x128xf32>
    %205 = tpu.matmul %204, %64, %cst_76 {dimension_numbers = #tpu.dot_dimension_numbers<[1], [0], [0], [1], [0, 0, 1, 1], [], []>} : vector<8x128xf32>, vector<128x128xf32>, vector<8x128xf32> -> vector<8x128xf32>
    %206 = vector.broadcast %201 : vector<8x1xf32> to vector<8x128xf32>
    %207 = vector.broadcast %65 : vector<1x128xf32> to vector<8x128xf32>
    %208 = arith.addf %206, %207 : vector<8x128xf32>
    %209 = math.log %205 : vector<8x128xf32>
    %210 = arith.addf %208, %209 : vector<8x128xf32>
    %211 = arith.addf %210, %197 : vector<8x128xf32>
    %cst_77 = arith.constant -1.000000e+30 : f32
    %212 = vector.broadcast %cst_77 : f32 to vector<8x128xf32>
    %213 = arith.maximumf %211, %212 : vector<8x128xf32>
    %cst_78 = arith.constant 0.000000e+00 : f32
    %214 = vector.broadcast %cst_78 : f32 to vector<8x1xf32>
    %215 = arith.cmpf ogt, %199, %214 : vector<8x1xf32>
    %216 = vector.shape_cast %215 : vector<8x1xi1> to vector<8x1xi1>
    %217 = vector.broadcast %216 : vector<8x1xi1> to vector<8x128xi1>
    %218 = arith.select %217, %213, %193 : vector<8x128xi1>, vector<8x128xf32>
    %c7_i32 = arith.constant 7 : i32
    %c8_i32_79 = arith.constant 8 : i32
    %219 = arith.muli %c7_i32, %c8_i32_79 : i32
    %220 = tpu.assume_multiple %219, 8 : i32
    %221 = arith.index_cast %220 : i32 to index
    %c0_80 = arith.constant 0 : index
    %222 = vector.load %arg14[%221, %c0_80] : memref<64x128xf32, #tpu.memory_space<vmem>>, vector<8x128xf32>
    %223 = arith.index_cast %220 : i32 to index
    %c0_81 = arith.constant 0 : index
    %224 = vector.load %arg10[%223, %c0_81] : memref<64x1xf32, #tpu.memory_space<vmem>>, vector<8x1xf32>
    %cst_82 = arith.constant dense<0xFF800000> : vector<8xf32>
    %225 = vector.multi_reduction <maximumf>, %218, %cst_82 [1] : vector<8x128xf32> to vector<8xf32>
    %226 = vector.shape_cast %225 : vector<8xf32> to vector<8x1xf32>
    %227 = vector.broadcast %226 : vector<8x1xf32> to vector<8x128xf32>
    %228 = arith.subf %218, %227 : vector<8x128xf32>
    %229 = math.exp %228 : vector<8x128xf32>
    %cst_83 = arith.constant dense<0.000000e+00> : vector<8x128xf32>
    %230 = tpu.matmul %229, %64, %cst_83 {dimension_numbers = #tpu.dot_dimension_numbers<[1], [0], [0], [1], [0, 0, 1, 1], [], []>} : vector<8x128xf32>, vector<128x128xf32>, vector<8x128xf32> -> vector<8x128xf32>
    %231 = vector.broadcast %226 : vector<8x1xf32> to vector<8x128xf32>
    %232 = vector.broadcast %65 : vector<1x128xf32> to vector<8x128xf32>
    %233 = arith.addf %231, %232 : vector<8x128xf32>
    %234 = math.log %230 : vector<8x128xf32>
    %235 = arith.addf %233, %234 : vector<8x128xf32>
    %236 = arith.addf %235, %222 : vector<8x128xf32>
    %cst_84 = arith.constant -1.000000e+30 : f32
    %237 = vector.broadcast %cst_84 : f32 to vector<8x128xf32>
    %238 = arith.maximumf %236, %237 : vector<8x128xf32>
    %cst_85 = arith.constant 0.000000e+00 : f32
    %239 = vector.broadcast %cst_85 : f32 to vector<8x1xf32>
    %240 = arith.cmpf ogt, %224, %239 : vector<8x1xf32>
    %241 = vector.shape_cast %240 : vector<8x1xi1> to vector<8x1xi1>
    %242 = vector.broadcast %241 : vector<8x1xi1> to vector<8x128xi1>
    %243 = arith.select %242, %238, %218 : vector<8x128xi1>, vector<8x128xf32>
    %c7_i32_86 = arith.constant 7 : i32
    %244 = vector.broadcast %8 : vector<1x128xf32> to vector<8x128xf32>
    %245 = arith.addf %243, %244 : vector<8x128xf32>
    %cst_87 = arith.constant dense<0xFF800000> : vector<8xf32>
    %246 = vector.multi_reduction <maximumf>, %245, %cst_87 [1] : vector<8x128xf32> to vector<8xf32>
    %247 = vector.shape_cast %246 : vector<8xf32> to vector<8x1xf32>
    %248 = vector.broadcast %247 : vector<8x1xf32> to vector<8x128xf32>
    %249 = arith.subf %245, %248 : vector<8x128xf32>
    %250 = math.exp %249 : vector<8x128xf32>
    %cst_88 = arith.constant dense<0.000000e+00> : vector<8xf32>
    %251 = vector.multi_reduction <add>, %250, %cst_88 [1] : vector<8x128xf32> to vector<8xf32>
    %252 = vector.shape_cast %251 : vector<8xf32> to vector<8x1xf32>
    %253 = math.log %252 : vector<8x1xf32>
    %254 = arith.addf %247, %253 : vector<8x1xf32>
    %255 = arith.mulf %254, %10 : vector<8x1xf32>
    %cst_89 = arith.constant dense<0.000000e+00> : vector<8xf32>
    %256 = vector.multi_reduction <add>, %255, %cst_89 [1] : vector<8x1xf32> to vector<8xf32>
    %257 = vector.shape_cast %256 : vector<8xf32> to vector<8x1xf32>
    %cst_90 = arith.constant dense<0.000000e+00> : vector<1xf32>
    %258 = vector.multi_reduction <add>, %257, %cst_90 [0] : vector<8x1xf32> to vector<1xf32>
    %259 = vector.shape_cast %258 : vector<1xf32> to vector<1x1xf32>
    %260 = arith.subf %259, %63 : vector<1x1xf32>
    %c0_91 = arith.constant 0 : index
    %c0_92 = arith.constant 0 : index
    %261 = vector.load %arg13[%c0_91, %c0_92] : memref<1x1xf32, #tpu.memory_space<vmem>>, vector<1x1xf32>
    tpu.vector_store %arg13[%c0_91, %c0_92], %260 {strides = array<i32>} : memref<1x1xf32, #tpu.memory_space<vmem>>, vector<1x1xf32>,
    return
  }
  func.func @transform_0(%arg0: i32) -> (i32, i32) {
    %c0_i32 = arith.constant 0 : i32
    %c0_i32_0 = arith.constant 0 : i32
    return %arg0, %c0_i32 : i32, i32
  }
  func.func @transform_1(%arg0: i32) -> (i32, i32) {
    %c0_i32 = arith.constant 0 : i32
    %c0_i32_0 = arith.constant 0 : i32
    %c0_i32_1 = arith.constant 0 : i32
    return %c0_i32, %c0_i32_0 : i32, i32
  }
  func.func @transform_2(%arg0: i32) -> (i32, i32) {
    %c0_i32 = arith.constant 0 : i32
    %c0_i32_0 = arith.constant 0 : i32
    %c0_i32_1 = arith.constant 0 : i32
    return %c0_i32, %c0_i32_0 : i32, i32
  }
  func.func @transform_3(%arg0: i32) -> (i32, i32) {
    %c0_i32 = arith.constant 0 : i32
    %c0_i32_0 = arith.constant 0 : i32
    %c0_i32_1 = arith.constant 0 : i32
    return %c0_i32, %c0_i32_0 : i32, i32
  }
  func.func @transform_4(%arg0: i32) -> (i32, i32) {
    %c0_i32 = arith.constant 0 : i32
    %c0_i32_0 = arith.constant 0 : i32
    %c0_i32_1 = arith.constant 0 : i32
    return %c0_i32, %c0_i32_0 : i32, i32
  }
  func.func @transform_5(%arg0: i32) -> (i32, i32) {
    %c0_i32 = arith.constant 0 : i32
    %c0_i32_0 = arith.constant 0 : i32
    %c0_i32_1 = arith.constant 0 : i32
    return %c0_i32, %c0_i32_0 : i32, i32
  }
  func.func @transform_6(%arg0: i32) -> (i32, i32) {
    %c0_i32 = arith.constant 0 : i32
    %c0_i32_0 = arith.constant 0 : i32
    %c0_i32_1 = arith.constant 0 : i32
    return %c0_i32, %c0_i32_0 : i32, i32
  }
  func.func @transform_7(%arg0: i32) -> (i32, i32) {
    %c0_i32 = arith.constant 0 : i32
    %c0_i32_0 = arith.constant 0 : i32
    %c0_i32_1 = arith.constant 0 : i32
    return %c0_i32, %c0_i32_0 : i32, i32
  }
  func.func @transform_8(%arg0: i32) -> (i32, i32) {
    %c0_i32 = arith.constant 0 : i32
    %c0_i32_0 = arith.constant 0 : i32
    return %arg0, %c0_i32 : i32, i32
  }
  func.func @transform_9(%arg0: i32) -> (i32, i32) {
    %c0_i32 = arith.constant 0 : i32
    %c0_i32_0 = arith.constant 0 : i32
    return %arg0, %c0_i32 : i32, i32
  }
  func.func @transform_10(%arg0: i32) -> (i32, i32) {
    %c0_i32 = arith.constant 0 : i32
    %c0_i32_0 = arith.constant 0 : i32
    return %arg0, %c0_i32 : i32, i32
  }
  func.func @transform_11(%arg0: i32) -> (i32, i32) {
    %c0_i32 = arith.constant 0 : i32
    %c0_i32_0 = arith.constant 0 : i32
    return %arg0, %c0_i32 : i32, i32
  }
  func.func @transform_12(%arg0: i32) -> (i32, i32) {
    %c0_i32 = arith.constant 0 : i32
    %c0_i32_0 = arith.constant 0 : i32
    return %arg0, %c0_i32 : i32, i32
  }
}

</mosaic_0001>

<llo_original>
// kernel: model_forward.1
$region0: #{model_forward.1}
  #allocation0 [shape = 'u32[]', space=smem, size = 0x4, offset = 0x4, fixed_abs, tag = 'smem constant byte address 0x4 - core index']
  #allocation1 [shape = 'u32[72,128]{1,0:T(1,128)}', space=vmem, size = 0x9000, scoped, tag = 'internal scratch']
  #allocation2 [shape = 'f32[64,128]{1,0:T(8,128)}', space=vmem, size = 0x8000, scoped, tag = 'scratch operand']
  %s0 = inlined_call_operand.vmem [shape: bf16[64,32], index: 0, kind: input, shape index: {}]
  %s1 = inlined_call_operand.vmem [shape: bf16[32,128], index: 1, kind: input, shape index: {}]
  %s2 = inlined_call_operand.vmem [shape: f32[1,128], index: 2, kind: input, shape index: {}]
  %s3 = inlined_call_operand.vmem [shape: f32[1,128], index: 3, kind: input, shape index: {}]
  %s4 = inlined_call_operand.vmem [shape: f32[1,128], index: 4, kind: input, shape index: {}]
  %s5 = inlined_call_operand.vmem [shape: f32[128,128], index: 5, kind: input, shape index: {}]
  %s6 = inlined_call_operand.vmem [shape: f32[128,128], index: 6, kind: input, shape index: {}]
  %s7 = inlined_call_operand.vmem [shape: f32[1,128], index: 7, kind: input, shape index: {}]
  %s8 = inlined_call_operand.vmem [shape: s32[64,1], index: 8, kind: input, shape index: {}]
  %s9 = inlined_call_operand.vmem [shape: f32[64,1], index: 9, kind: input, shape index: {}]
  %s10 = inlined_call_operand.vmem [shape: s32[8,1], index: 10, kind: input, shape index: {}]
  %s11 = inlined_call_operand.vmem [shape: f32[8,1], index: 11, kind: input, shape index: {}]
  %s12 = inlined_call_operand.hbm [shape: f32[1,1], index: 12, kind: output, shape index: {}]
  %s13 = sld [smem:[#allocation0]]
  $region58: #{model_forward.1} parent=0
    _
  %s15 = ssub.s32 1, %s13
  %s16 = scalar_select 0, %s15, %s13
  $region1: #{model_forward.1} parent=0
    #allocation3 [shape = 'u8[512]{0}', space=vmem, size = 0x400, scoped, tag = 'output window, operand 0, single buffered']
    #allocation4 [shape = 's32[1]{0}', space=sflag, size = 0x4, scoped, tag = 'scoped memory for model_forward.1']
    %17 = vsyncpa [#allocation4], 0
    // Predicated region
    $region2: #{model_forward.1} parent=1 // pred_check
      _
    $region3: #{model_forward.1} parent=1 // pred_check_branch
      %19 = sbr.rel (0) target = $region5
    $region4: #{model_forward.1} parent=1 // pred_region
      _
    $region5: #{model_forward.1} parent=1 // pred_fallthru
      _
    // Predicated region
    $region6: #{model_forward.1} parent=1 // pred_check
      _
    $region7: #{model_forward.1} parent=1 // pred_check_branch
      %21 = sbr.rel (0) target = $region9
    $region8: #{model_forward.1} parent=1 // pred_region
      _
    $region9: #{model_forward.1} parent=1 // pred_fallthru
      _
    // Predicated region
    $region10: #{model_forward.1} parent=1 // pred_check
      _
    $region11: #{model_forward.1} parent=1 // pred_check_branch
      %23 = sbr.rel (0) target = $region13
    $region12: #{model_forward.1} parent=1 // pred_region
      _
    $region13: #{model_forward.1} parent=1 // pred_fallthru
      _
    // Predicated region
    $region14: #{model_forward.1} parent=1 // pred_check
      _
    $region15: #{model_forward.1} parent=1 // pred_check_branch
      %25 = sbr.rel (0) target = $region17
    $region16: #{model_forward.1} parent=1 // pred_region
      _
    $region17: #{model_forward.1} parent=1 // pred_fallthru
      _
    // Predicated region
    $region18: #{model_forward.1} parent=1 // pred_check
      _
    $region19: #{model_forward.1} parent=1 // pred_check_branch
      %27 = sbr.rel (0) target = $region21
    $region20: #{model_forward.1} parent=1 // pred_region
      _
    $region21: #{model_forward.1} parent=1 // pred_fallthru
      _
    // Predicated region
    $region22: #{model_forward.1} parent=1 // pred_check
      _
    $region23: #{model_forward.1} parent=1 // pred_check_branch
      %29 = sbr.rel (0) target = $region25
    $region24: #{model_forward.1} parent=1 // pred_region
      _
    $region25: #{model_forward.1} parent=1 // pred_fallthru
      _
    // Predicated region
    $region26: #{model_forward.1} parent=1 // pred_check
      _
    $region27: #{model_forward.1} parent=1 // pred_check_branch
      %31 = sbr.rel (0) target = $region29
    $region28: #{model_forward.1} parent=1 // pred_region
      _
    $region29: #{model_forward.1} parent=1 // pred_fallthru
      _
    // Predicated region
    $region30: #{model_forward.1} parent=1 // pred_check
      _
    $region31: #{model_forward.1} parent=1 // pred_check_branch
      %33 = sbr.rel (0) target = $region33
    $region32: #{model_forward.1} parent=1 // pred_region
      _
    $region33: #{model_forward.1} parent=1 // pred_fallthru
      _
    // Predicated region
    $region34: #{model_forward.1} parent=1 // pred_check
      _
    $region35: #{model_forward.1} parent=1 // pred_check_branch
      %35 = sbr.rel (0) target = $region37
    $region36: #{model_forward.1} parent=1 // pred_region
      _
    $region37: #{model_forward.1} parent=1 // pred_fallthru
      _
    // Predicated region
    $region38: #{model_forward.1} parent=1 // pred_check
      _
    $region39: #{model_forward.1} parent=1 // pred_check_branch
      %37 = sbr.rel (0) target = $region41
    $region40: #{model_forward.1} parent=1 // pred_region
      _
    $region41: #{model_forward.1} parent=1 // pred_fallthru
      _
    // Predicated region
    $region42: #{model_forward.1} parent=1 // pred_check
      _
    $region43: #{model_forward.1} parent=1 // pred_check_branch
      %39 = sbr.rel (0) target = $region45
    $region44: #{model_forward.1} parent=1 // pred_region
      _
    $region45: #{model_forward.1} parent=1 // pred_fallthru
      _
    // Predicated region
    $region46: #{model_forward.1} parent=1 // pred_check
      _
    $region47: #{model_forward.1} parent=1 // pred_check_branch
      %41 = sbr.rel (0) target = $region49
    $region48: #{model_forward.1} parent=1 // pred_region
      _
    $region49: #{model_forward.1} parent=1 // pred_fallthru
      _
    %v43 = vld [vmem:[%s0] sm:$0xf]
    %v44 = vld [vmem:[%s0 + $0x4] sm:$0xf]
    %v45 = vld [vmem:[%s0 + $0x8] sm:$0xf]
    %v46 = vld [vmem:[%s0 + $0xc] sm:$0xf]
    %v47 = vld [vmem:[%s0 + $0x10] sm:$0xf]
    %v48 = vld [vmem:[%s0 + $0x14] sm:$0xf]
    %v49 = vld [vmem:[%s0 + $0x18] sm:$0xf]
    %v50 = vld [vmem:[%s0 + $0x1c] sm:$0xf]
    %v51 = vld [vmem:[%s1] sm:$0xf]
    %v52 = vld [vmem:[%s1 + $0x4] sm:$0xf]
    %v53 = vld [vmem:[%s1 + $0x8] sm:$0xf]
    %v54 = vld [vmem:[%s1 + $0xc] sm:$0xf]
    %v55 = vld [vmem:[%s2] sm:$0x1]
    %v57 = vperm.slane %v55, 0
    %v67 = vunpack.c.l.b16 %v43
    %v68 = vunpack.c.l.b16 %v44
    %v69 = vunpack.c.l.b16 %v45
    %v70 = vunpack.c.l.b16 %v46
    %v71 = vunpack.c.l.b16 %v47
    %v72 = vunpack.c.l.b16 %v48
    %v73 = vunpack.c.l.b16 %v49
    %v74 = vunpack.c.l.b16 %v50
    %v75 = vpack.c.b16 %v68, %v67
    %v76 = vpack.c.b16 %v70, %v69
    %v77 = vpack.c.b16 %v72, %v71
    %v78 = vpack.c.b16 %v74, %v73
    %v83 = vunpack.c.l.b16 %v51
    %v84 = vunpack.c.l.b16 %v52
    %v85 = vunpack.c.l.b16 %v53
    %v86 = vunpack.c.l.b16 %v54
    %v87 = vpack.c.b16 %v84, %v83
    %v88 = vpack.c.b16 %v86, %v85
    %vm91 = vcmask 261120
    %v93 = vsel %vm91, %v75, 0
    %v96 = vsel %vm91, %v76, 0
    %v99 = vsel %vm91, %v77, 0
    %v102 = vsel %vm91, %v78, 0
    %104 = vmatpush.bf16.msra.mxu0 0
    %105 = vmatpush.bf16.msra.mxu0 0
    %106 = vmatpush.bf16.msra.mxu0 0
    %107 = vmatpush.bf16.msra.mxu0 0
    %108 = vmatpush.bf16.msra.mxu0 0
    %109 = vmatpush.bf16.msra.mxu0 0
    %110 = vmatpush.bf16.msra.mxu0 %v88
    %111 = vmatpush.bf16.msra.mxu0 %v87
    %112 = vmatmul.bf16.gmra.mxu0 %v93
    %v113 = vpop.f32.mrf.mxu0
    %v114 = vadd.f32 %v57, %v113
    %v115 = vpop.f32.mrf.mxu0
    %v116 = vadd.f32 %v57, %v115
    %117 = vmatmul.bf16.gmra.mxu0 %v96
    %v118 = vpop.f32.mrf.mxu0
    %v119 = vadd.f32 %v57, %v118
    %v120 = vpop.f32.mrf.mxu0
    %v121 = vadd.f32 %v57, %v120
    %122 = vmatmul.bf16.gmra.mxu0 %v99
    %v123 = vpop.f32.mrf.mxu0
    %v124 = vadd.f32 %v57, %v123
    %v125 = vpop.f32.mrf.mxu0
    %v126 = vadd.f32 %v57, %v125
    %127 = vmatmul.bf16.gmra.mxu0 %v102
    %v128 = vpop.f32.mrf.mxu0
    %v129 = vadd.f32 %v57, %v128
    %v130 = vpop.f32.mrf.mxu0
    %v131 = vadd.f32 %v57, %v130
    %132 = vdwg.mxu0
    %133 = vst [vmem:[#allocation2] sm:$0xff] %v114
    %134 = vst [vmem:[#allocation2 + $0x8] sm:$0xff] %v116
    %135 = vst [vmem:[#allocation2 + $0x10] sm:$0xff] %v119
    %136 = vst [vmem:[#allocation2 + $0x18] sm:$0xff] %v121
    %137 = vst [vmem:[#allocation2 + $0x20] sm:$0xff] %v124
    %138 = vst [vmem:[#allocation2 + $0x28] sm:$0xff] %v126
    %139 = vst [vmem:[#allocation2 + $0x30] sm:$0xff] %v129
    %140 = vst [vmem:[#allocation2 + $0x38] sm:$0xff] %v131
    %v141 = vld [vmem:[%s3] sm:$0x1]
    %v142 = vld [vmem:[%s4] sm:$0x1]
    %v143 = vld [vmem:[%s9] sm:$0xff]
    %v144 = vld [vmem:[%s9 + $0x8] sm:$0xff]
    %v145 = vld [vmem:[%s9 + $0x10] sm:$0xff]
    %v146 = vld [vmem:[%s9 + $0x18] sm:$0xff]
    %v147 = vld [vmem:[%s9 + $0x20] sm:$0xff]
    %v148 = vld [vmem:[%s9 + $0x28] sm:$0xff]
    %v149 = vld [vmem:[%s9 + $0x30] sm:$0xff]
    %v150 = vld [vmem:[%s9 + $0x38] sm:$0xff]
    %v151 = vld [vmem:[%s11] sm:$0xff]
    %v152 = vlaneseq
    %v153 = vand.u32 %v152, 127
    %v154 = vld [vmem:[%s8] sm:$0xff]
    %v155 = vld [vmem:[%s8 + $0x8] sm:$0xff]
    %v156 = vld [vmem:[%s8 + $0x10] sm:$0xff]
    %v157 = vld [vmem:[%s8 + $0x18] sm:$0xff]
    %v158 = vld [vmem:[%s8 + $0x20] sm:$0xff]
    %v159 = vld [vmem:[%s8 + $0x28] sm:$0xff]
    %v160 = vld [vmem:[%s8 + $0x30] sm:$0xff]
    %v161 = vld [vmem:[%s8 + $0x38] sm:$0xff]
    %162 = vset.pattern.permute.xlu0 0
    %163 = vperm.xlu0 %162, %v154
    %v164 = vpop.permute.xlu0 %163
    %165 = vset.pattern.permute.xlu0 0
    %166 = vperm.xlu0 %165, %v155
    %v167 = vpop.permute.xlu0 %166
    %168 = vset.pattern.permute.xlu0 0
    %169 = vperm.xlu0 %168, %v156
    %v170 = vpop.permute.xlu0 %169
    %171 = vset.pattern.permute.xlu0 0
    %172 = vperm.xlu0 %171, %v157
    %v173 = vpop.permute.xlu0 %172
    %174 = vset.pattern.permute.xlu0 0
    %175 = vperm.xlu0 %174, %v158
    %v176 = vpop.permute.xlu0 %175
    %177 = vset.pattern.permute.xlu0 0
    %178 = vperm.xlu0 %177, %v159
    %v179 = vpop.permute.xlu0 %178
    %180 = vset.pattern.permute.xlu0 0
    %181 = vperm.xlu0 %180, %v160
    %v182 = vpop.permute.xlu0 %181
    %183 = vset.pattern.permute.xlu0 0
    %184 = vperm.xlu0 %183, %v161
    %v185 = vpop.permute.xlu0 %184
    %vm186 = vcmp.eq.s32.totalorder %v153, %v164
    %vm187 = vcmp.eq.s32.totalorder %v153, %v167
    %vm188 = vcmp.eq.s32.totalorder %v153, %v170
    %vm189 = vcmp.eq.s32.totalorder %v153, %v173
    %vm190 = vcmp.eq.s32.totalorder %v153, %v176
    %vm191 = vcmp.eq.s32.totalorder %v153, %v179
    %vm192 = vcmp.eq.s32.totalorder %v153, %v182
    %vm193 = vcmp.eq.s32.totalorder %v153, %v185
    %v194 = vsel %vm186, 1, 0
    %v195 = vsel %vm187, 1, 0
    %v196 = vsel %vm188, 1, 0
    %v197 = vsel %vm189, 1, 0
    %v198 = vsel %vm190, 1, 0
    %v199 = vsel %vm191, 1, 0
    %v200 = vsel %vm192, 1, 0
    %v201 = vsel %vm193, 1, 0
    %v202 = vcvt.s32.f32 %v194
    %v203 = vcvt.s32.f32 %v195
    %v204 = vcvt.s32.f32 %v196
    %v205 = vcvt.s32.f32 %v197
    %v206 = vcvt.s32.f32 %v198
    %v207 = vcvt.s32.f32 %v199
    %v208 = vcvt.s32.f32 %v200
    %v209 = vcvt.s32.f32 %v201
    %v210 = vld [vmem:[#allocation2] sm:$0xff]
    %v211 = vld [vmem:[#allocation2 + $0x8] sm:$0xff]
    %v212 = vld [vmem:[#allocation2 + $0x10] sm:$0xff]
    %v213 = vld [vmem:[#allocation2 + $0x18] sm:$0xff]
    %v214 = vld [vmem:[#allocation2 + $0x20] sm:$0xff]
    %v215 = vld [vmem:[#allocation2 + $0x28] sm:$0xff]
    %v216 = vld [vmem:[#allocation2 + $0x30] sm:$0xff]
    %v217 = vld [vmem:[#allocation2 + $0x38] sm:$0xff]
    %v218 = vmul.f32 %v202, %v210
    %v219 = vmul.f32 %v203, %v211
    %v220 = vmul.f32 %v204, %v212
    %v221 = vmul.f32 %v205, %v213
    %v222 = vmul.f32 %v206, %v214
    %v223 = vmul.f32 %v207, %v215
    %v224 = vmul.f32 %v208, %v216
    %v225 = vmul.f32 %v209, %v217
    %227 = vset.pattern.permute.xlu0 0
    %228 = vperm.xlu0 %227, %v143
    %v229 = vpop.permute.xlu0 %228
    %232 = vset.pattern.permute.xlu0 0
    %233 = vperm.xlu0 %232, %v144
    %v234 = vpop.permute.xlu0 %233
    %237 = vset.pattern.permute.xlu0 0
    %238 = vperm.xlu0 %237, %v145
    %v239 = vpop.permute.xlu0 %238
    %242 = vset.pattern.permute.xlu0 0
    %243 = vperm.xlu0 %242, %v146
    %v244 = vpop.permute.xlu0 %243
    %247 = vset.pattern.permute.xlu0 0
    %248 = vperm.xlu0 %247, %v147
    %v249 = vpop.permute.xlu0 %248
    %252 = vset.pattern.permute.xlu0 0
    %253 = vperm.xlu0 %252, %v148
    %v254 = vpop.permute.xlu0 %253
    %257 = vset.pattern.permute.xlu0 0
    %258 = vperm.xlu0 %257, %v149
    %v259 = vpop.permute.xlu0 %258
    %262 = vset.pattern.permute.xlu0 0
    %263 = vperm.xlu0 %262, %v150
    %v264 = vpop.permute.xlu0 %263
    %v266 = vmul.f32 %v218, %v229
    %v267 = vmul.f32 %v219, %v234
    %v268 = vmul.f32 %v220, %v239
    %v269 = vmul.f32 %v221, %v244
    %v270 = vmul.f32 %v222, %v249
    %v271 = vmul.f32 %v223, %v254
    %v272 = vmul.f32 %v224, %v259
    %v273 = vmul.f32 %v225, %v264
    %274 = vadd.xlane.f32.xlu0 %v266
    %v275 = vpop.xlane.xlu0 %274
    %276 = vadd.xlane.f32.xlu0 %v267
    %v277 = vpop.xlane.xlu0 %276
    %278 = vadd.xlane.f32.xlu0 %v268
    %v279 = vpop.xlane.xlu0 %278
    %280 = vadd.xlane.f32.xlu0 %v269
    %v281 = vpop.xlane.xlu0 %280
    %282 = vadd.xlane.f32.xlu0 %v270
    %v283 = vpop.xlane.xlu0 %282
    %284 = vadd.xlane.f32.xlu0 %v271
    %v285 = vpop.xlane.xlu0 %284
    %286 = vadd.xlane.f32.xlu0 %v272
    %v287 = vpop.xlane.xlu0 %286
    %288 = vadd.xlane.f32.xlu0 %v273
    %v289 = vpop.xlane.xlu0 %288
    %v290 = vadd.f32 %v275, %v277
    %v291 = vadd.f32 %v290, %v279
    %v292 = vadd.f32 %v291, %v281
    %v293 = vadd.f32 %v292, %v283
    %v294 = vadd.f32 %v293, %v285
    %v295 = vadd.f32 %v294, %v287
    %v296 = vadd.f32 %v295, %v289
    %v297 = vrot.slane %v296, 4
    %v298 = vadd.f32 %v296, %v297
    %v299 = vrot.slane %v298, 2
    %v300 = vadd.f32 %v298, %v299
    %v301 = vrot.slane %v300, 1
    %v302 = vadd.f32 %v300, %v301
    %v304 = vperm.slane %v141, 0
    %v306 = vmul.f32 %v202, %v304
    %v307 = vmul.f32 %v306, %v229
    %308 = vadd.xlane.f32.xlu0 %v307
    %v309 = vpop.xlane.xlu0 %308
    %v310 = vrot.slane %v309, 4
    %v311 = vadd.f32 %v309, %v310
    %v312 = vrot.slane %v311, 2
    %v313 = vadd.f32 %v311, %v312
    %v314 = vrot.slane %v313, 1
    %v315 = vadd.f32 %v313, %v314
    %v316 = vld [vmem:[%s5] sm:$0xff]
    %v317 = vld [vmem:[%s5 + $0x8] sm:$0xff]
    %v318 = vld [vmem:[%s5 + $0x10] sm:$0xff]
    %v319 = vld [vmem:[%s5 + $0x18] sm:$0xff]
    %v320 = vld [vmem:[%s5 + $0x20] sm:$0xff]
    %v321 = vld [vmem:[%s5 + $0x28] sm:$0xff]
    %v322 = vld [vmem:[%s5 + $0x30] sm:$0xff]
    %v323 = vld [vmem:[%s5 + $0x38] sm:$0xff]
    %v324 = vld [vmem:[%s5 + $0x40] sm:$0xff]
    %v325 = vld [vmem:[%s5 + $0x48] sm:$0xff]
    %v326 = vld [vmem:[%s5 + $0x50] sm:$0xff]
    %v327 = vld [vmem:[%s5 + $0x58] sm:$0xff]
    %v328 = vld [vmem:[%s5 + $0x60] sm:$0xff]
    %v329 = vld [vmem:[%s5 + $0x68] sm:$0xff]
    %v330 = vld [vmem:[%s5 + $0x70] sm:$0xff]
    %v331 = vld [vmem:[%s5 + $0x78] sm:$0xff]
    %332 = vmatpush.msra.mxu0 %v331
    %333 = vmatpush.msra.mxu0 %v330
    %334 = vmatpush.msra.mxu0 %v329
    %335 = vmatpush.msra.mxu0 %v328
    %336 = vmatpush.msra.mxu0 %v327
    %337 = vmatpush.msra.mxu0 %v326
    %338 = vmatpush.msra.mxu0 %v325
    %339 = vmatpush.msra.mxu0 %v324
    %340 = vmatpush.msra.mxu0 %v323
    %341 = vmatpush.msra.mxu0 %v322
    %342 = vmatpush.msra.mxu0 %v321
    %343 = vmatpush.msra.mxu0 %v320
    %344 = vmatpush.msra.mxu0 %v319
    %345 = vmatpush.msra.mxu0 %v318
    %346 = vmatpush.msra.mxu0 %v317
    %347 = vmatpush.msra.mxu0 %v316
    %348 = vmatmul.f32.gmra.mxu0 %v202
    %v349 = vpop.f32.mrf.mxu0
    %v350 = vadd.f32 0.0, %v349
    %351 = vmatmul.f32.gmra.mxu0 %v203
    %v352 = vpop.f32.mrf.mxu0
    %v353 = vadd.f32 0.0, %v352
    %354 = vmatmul.f32.gmra.mxu0 %v204
    %v355 = vpop.f32.mrf.mxu0
    %v356 = vadd.f32 0.0, %v355
    %357 = vmatmul.f32.gmra.mxu0 %v205
    %v358 = vpop.f32.mrf.mxu0
    %v359 = vadd.f32 0.0, %v358
    %360 = vmatmul.f32.gmra.mxu0 %v206
    %v361 = vpop.f32.mrf.mxu0
    %v362 = vadd.f32 0.0, %v361
    %363 = vmatmul.f32.gmra.mxu0 %v207
    %v364 = vpop.f32.mrf.mxu0
    %v365 = vadd.f32 0.0, %v364
    %366 = vmatmul.f32.gmra.mxu0 %v208
    %v367 = vpop.f32.mrf.mxu0
    %v368 = vadd.f32 0.0, %v367
    %369 = vdwg.mxu0
    %v370 = vmul.f32 %v350, %v203
    %v371 = vmul.f32 %v353, %v204
    %v372 = vmul.f32 %v356, %v205
    %v373 = vmul.f32 %v359, %v206
    %v374 = vmul.f32 %v362, %v207
    %v375 = vmul.f32 %v365, %v208
    %v376 = vmul.f32 %v368, %v209
    %v377 = vmul.f32 %v370, %v234
    %v378 = vmul.f32 %v371, %v239
    %v379 = vmul.f32 %v372, %v244
    %v380 = vmul.f32 %v373, %v249
    %v381 = vmul.f32 %v374, %v254
    %v382 = vmul.f32 %v375, %v259
    %v383 = vmul.f32 %v376, %v264
    %384 = vadd.xlane.f32.xlu0 %v377
    %v385 = vpop.xlane.xlu0 %384
    %386 = vadd.xlane.f32.xlu0 %v378
    %v387 = vpop.xlane.xlu0 %386
    %388 = vadd.xlane.f32.xlu0 %v379
    %v389 = vpop.xlane.xlu0 %388
    %390 = vadd.xlane.f32.xlu0 %v380
    %v391 = vpop.xlane.xlu0 %390
    %392 = vadd.xlane.f32.xlu0 %v381
    %v393 = vpop.xlane.xlu0 %392
    %394 = vadd.xlane.f32.xlu0 %v382
    %v395 = vpop.xlane.xlu0 %394
    %396 = vadd.xlane.f32.xlu0 %v383
    %v397 = vpop.xlane.xlu0 %396
    %v398 = vadd.f32 %v385, %v387
    %v399 = vadd.f32 %v398, %v389
    %v400 = vadd.f32 %v399, %v391
    %v401 = vadd.f32 %v400, %v393
    %v402 = vadd.f32 %v401, %v395
    %v403 = vadd.f32 %v402, %v397
    %v404 = vrot.slane %v403, 4
    %v405 = vadd.f32 %v403, %v404
    %v406 = vrot.slane %v405, 2
    %v407 = vadd.f32 %v405, %v406
    %v408 = vrot.slane %v407, 1
    %v409 = vadd.f32 %v407, %v408
    %v410 = vld [vmem:[%s10] sm:$0xff]
    %411 = vset.pattern.permute.xlu0 0
    %412 = vperm.xlu0 %411, %v410
    %v413 = vpop.permute.xlu0 %412
    %vm414 = vcmp.eq.s32.totalorder %v153, %v413
    %v415 = vsel %vm414, 1, 0
    %v416 = vcvt.s32.f32 %v415
    %v418 = vperm.slane %v142, 0
    %v420 = vmul.f32 %v416, %v418
    %422 = vset.pattern.permute.xlu0 0
    %423 = vperm.xlu0 %422, %v151
    %v424 = vpop.permute.xlu0 %423
    %v426 = vmul.f32 %v420, %v424
    %427 = vadd.xlane.f32.xlu0 %v426
    %v428 = vpop.xlane.xlu0 %427
    %v429 = vrot.slane %v428, 4
    %v430 = vadd.f32 %v428, %v429
    %v431 = vrot.slane %v430, 2
    %v432 = vadd.f32 %v430, %v431
    %v433 = vrot.slane %v432, 1
    %v434 = vadd.f32 %v432, %v433
    %v435 = vadd.f32 %v302, %v315
    %v436 = vadd.f32 %v435, %v409
    %v437 = vadd.f32 %v436, %v434
    %v438 = vld [vmem:[%s6] sm:$0xff]
    %v439 = vld [vmem:[%s6 + $0x8] sm:$0xff]
    %v440 = vld [vmem:[%s6 + $0x10] sm:$0xff]
    %v441 = vld [vmem:[%s6 + $0x18] sm:$0xff]
    %v442 = vld [vmem:[%s6 + $0x20] sm:$0xff]
    %v443 = vld [vmem:[%s6 + $0x28] sm:$0xff]
    %v444 = vld [vmem:[%s6 + $0x30] sm:$0xff]
    %v445 = vld [vmem:[%s6 + $0x38] sm:$0xff]
    %v446 = vld [vmem:[%s6 + $0x40] sm:$0xff]
    %v447 = vld [vmem:[%s6 + $0x48] sm:$0xff]
    %v448 = vld [vmem:[%s6 + $0x50] sm:$0xff]
    %v449 = vld [vmem:[%s6 + $0x58] sm:$0xff]
    %v450 = vld [vmem:[%s6 + $0x60] sm:$0xff]
    %v451 = vld [vmem:[%s6 + $0x68] sm:$0xff]
    %v452 = vld [vmem:[%s6 + $0x70] sm:$0xff]
    %v453 = vld [vmem:[%s6 + $0x78] sm:$0xff]
    %v454 = vld [vmem:[%s7] sm:$0x1]
    %v455 = vld [vmem:[#allocation2] sm:$0xff]
    %v456 = vadd.f32 %v304, %v455
    %s457 = scalar_lea.vmem [#allocation2], 8
    %v458 = vld [vmem:[%s457] sm:$0xff]
    %s459 = scalar_lea.vmem %s9, 8
    %v460 = vld [vmem:[%s459] sm:$0xff]
    %461 = vmax.xlane.f32.xlu0 %v456
    %v462 = vpop.xlane.xlu0 %461
    %v463 = vsub.f32 %v456, %v462
    %v464 = vmul.f32 %v463, 1.442695
    %v465 = vpow.pop %v464
    %466 = vmatpush.msra.mxu0 %v453
    %467 = vmatpush.msra.mxu0 %v452
    %468 = vmatpush.msra.mxu0 %v451
    %469 = vmatpush.msra.mxu0 %v450
    %470 = vmatpush.msra.mxu0 %v449
    %471 = vmatpush.msra.mxu0 %v448
    %472 = vmatpush.msra.mxu0 %v447
    %473 = vmatpush.msra.mxu0 %v446
    %474 = vmatpush.msra.mxu0 %v445
    %475 = vmatpush.msra.mxu0 %v444
    %476 = vmatpush.msra.mxu0 %v443
    %477 = vmatpush.msra.mxu0 %v442
    %478 = vmatpush.msra.mxu0 %v441
    %479 = vmatpush.msra.mxu0 %v440
    %480 = vmatpush.msra.mxu0 %v439
    %481 = vmatpush.msra.mxu0 %v438
    %482 = vmatmul.f32.gmra.mxu0 %v465
    %v483 = vpop.f32.mrf.mxu0
    %v484 = vadd.f32 0.0, %v483
    %485 = vdwg.mxu0
    %v487 = vperm.slane %v454, 0
    %v489 = vadd.f32 %v462, %v487
    %v490 = vlog2.pop %v484
    %v491 = vmul.f32 %v490, 0.6931472
    %v492 = vadd.f32 %v489, %v491
    %v493 = vadd.f32 %v492, %v458
    %v494 = vmax.f32 %v493, -1e+30
    %vm495 = vcmp.gt.f32.partialorder %v460, 0.0
    %v496 = vsel %vm495, 1, 0
    %497 = vset.pattern.permute.xlu0 0
    %498 = vperm.xlu0 %497, %v496
    %v499 = vpop.permute.xlu0 %498
    %vm500 = vcmp.eq.s32.totalorder %v499, 1
    %v501 = vsel %vm500, %v494, %v456
    %s502 = scalar_lea.vmem [#allocation2], 16
    %v503 = vld [vmem:[%s502] sm:$0xff]
    %s504 = scalar_lea.vmem %s9, 16
    %v505 = vld [vmem:[%s504] sm:$0xff]
    %506 = vmax.xlane.f32.xlu0 %v501
    %v507 = vpop.xlane.xlu0 %506
    %v508 = vsub.f32 %v501, %v507
    %v509 = vmul.f32 %v508, 1.442695
    %v510 = vpow.pop %v509
    %511 = vmatpush.msra.mxu0 %v453
    %512 = vmatpush.msra.mxu0 %v452
    %513 = vmatpush.msra.mxu0 %v451
    %514 = vmatpush.msra.mxu0 %v450
    %515 = vmatpush.msra.mxu0 %v449
    %516 = vmatpush.msra.mxu0 %v448
    %517 = vmatpush.msra.mxu0 %v447
    %518 = vmatpush.msra.mxu0 %v446
    %519 = vmatpush.msra.mxu0 %v445
    %520 = vmatpush.msra.mxu0 %v444
    %521 = vmatpush.msra.mxu0 %v443
    %522 = vmatpush.msra.mxu0 %v442
    %523 = vmatpush.msra.mxu0 %v441
    %524 = vmatpush.msra.mxu0 %v440
    %525 = vmatpush.msra.mxu0 %v439
    %526 = vmatpush.msra.mxu0 %v438
    %527 = vmatmul.f32.gmra.mxu0 %v510
    %v528 = vpop.f32.mrf.mxu0
    %v529 = vadd.f32 0.0, %v528
    %530 = vdwg.mxu0
    %v531 = vadd.f32 %v507, %v487
    %v532 = vlog2.pop %v529
    %v533 = vmul.f32 %v532, 0.6931472
    %v534 = vadd.f32 %v531, %v533
    %v535 = vadd.f32 %v534, %v503
    %v536 = vmax.f32 %v535, -1e+30
    %vm537 = vcmp.gt.f32.partialorder %v505, 0.0
    %v538 = vsel %vm537, 1, 0
    %539 = vset.pattern.permute.xlu0 0
    %540 = vperm.xlu0 %539, %v538
    %v541 = vpop.permute.xlu0 %540
    %vm542 = vcmp.eq.s32.totalorder %v541, 1
    %v543 = vsel %vm542, %v536, %v501
    %s544 = scalar_lea.vmem [#allocation2], 24
    %v545 = vld [vmem:[%s544] sm:$0xff]
    %s546 = scalar_lea.vmem %s9, 24
    %v547 = vld [vmem:[%s546] sm:$0xff]
    %548 = vmax.xlane.f32.xlu0 %v543
    %v549 = vpop.xlane.xlu0 %548
    %v550 = vsub.f32 %v543, %v549
    %v551 = vmul.f32 %v550, 1.442695
    %v552 = vpow.pop %v551
    %553 = vmatpush.msra.mxu0 %v453
    %554 = vmatpush.msra.mxu0 %v452
    %555 = vmatpush.msra.mxu0 %v451
    %556 = vmatpush.msra.mxu0 %v450
    %557 = vmatpush.msra.mxu0 %v449
    %558 = vmatpush.msra.mxu0 %v448
    %559 = vmatpush.msra.mxu0 %v447
    %560 = vmatpush.msra.mxu0 %v446
    %561 = vmatpush.msra.mxu0 %v445
    %562 = vmatpush.msra.mxu0 %v444
    %563 = vmatpush.msra.mxu0 %v443
    %564 = vmatpush.msra.mxu0 %v442
    %565 = vmatpush.msra.mxu0 %v441
    %566 = vmatpush.msra.mxu0 %v440
    %567 = vmatpush.msra.mxu0 %v439
    %568 = vmatpush.msra.mxu0 %v438
    %569 = vmatmul.f32.gmra.mxu0 %v552
    %v570 = vpop.f32.mrf.mxu0
    %v571 = vadd.f32 0.0, %v570
    %572 = vdwg.mxu0
    %v573 = vadd.f32 %v549, %v487
    %v574 = vlog2.pop %v571
    %v575 = vmul.f32 %v574, 0.6931472
    %v576 = vadd.f32 %v573, %v575
    %v577 = vadd.f32 %v576, %v545
    %v578 = vmax.f32 %v577, -1e+30
    %vm579 = vcmp.gt.f32.partialorder %v547, 0.0
    %v580 = vsel %vm579, 1, 0
    %581 = vset.pattern.permute.xlu0 0
    %582 = vperm.xlu0 %581, %v580
    %v583 = vpop.permute.xlu0 %582
    %vm584 = vcmp.eq.s32.totalorder %v583, 1
    %v585 = vsel %vm584, %v578, %v543
    %s586 = scalar_lea.vmem [#allocation2], 32
    %v587 = vld [vmem:[%s586] sm:$0xff]
    %s588 = scalar_lea.vmem %s9, 32
    %v589 = vld [vmem:[%s588] sm:$0xff]
    %590 = vmax.xlane.f32.xlu0 %v585
    %v591 = vpop.xlane.xlu0 %590
    %v592 = vsub.f32 %v585, %v591
    %v593 = vmul.f32 %v592, 1.442695
    %v594 = vpow.pop %v593
    %595 = vmatpush.msra.mxu0 %v453
    %596 = vmatpush.msra.mxu0 %v452
    %597 = vmatpush.msra.mxu0 %v451
    %598 = vmatpush.msra.mxu0 %v450
    %599 = vmatpush.msra.mxu0 %v449
    %600 = vmatpush.msra.mxu0 %v448
    %601 = vmatpush.msra.mxu0 %v447
    %602 = vmatpush.msra.mxu0 %v446
    %603 = vmatpush.msra.mxu0 %v445
    %604 = vmatpush.msra.mxu0 %v444
    %605 = vmatpush.msra.mxu0 %v443
    %606 = vmatpush.msra.mxu0 %v442
    %607 = vmatpush.msra.mxu0 %v441
    %608 = vmatpush.msra.mxu0 %v440
    %609 = vmatpush.msra.mxu0 %v439
    %610 = vmatpush.msra.mxu0 %v438
    %611 = vmatmul.f32.gmra.mxu0 %v594
    %v612 = vpop.f32.mrf.mxu0
    %v613 = vadd.f32 0.0, %v612
    %614 = vdwg.mxu0
    %v615 = vadd.f32 %v591, %v487
    %v616 = vlog2.pop %v613
    %v617 = vmul.f32 %v616, 0.6931472
    %v618 = vadd.f32 %v615, %v617
    %v619 = vadd.f32 %v618, %v587
    %v620 = vmax.f32 %v619, -1e+30
    %vm621 = vcmp.gt.f32.partialorder %v589, 0.0
    %v622 = vsel %vm621, 1, 0
    %623 = vset.pattern.permute.xlu0 0
    %624 = vperm.xlu0 %623, %v622
    %v625 = vpop.permute.xlu0 %624
    %vm626 = vcmp.eq.s32.totalorder %v625, 1
    %v627 = vsel %vm626, %v620, %v585
    %s628 = scalar_lea.vmem [#allocation2], 40
    %v629 = vld [vmem:[%s628] sm:$0xff]
    %s630 = scalar_lea.vmem %s9, 40
    %v631 = vld [vmem:[%s630] sm:$0xff]
    %632 = vmax.xlane.f32.xlu0 %v627
    %v633 = vpop.xlane.xlu0 %632
    %v634 = vsub.f32 %v627, %v633
    %v635 = vmul.f32 %v634, 1.442695
    %v636 = vpow.pop %v635
    %637 = vmatpush.msra.mxu0 %v453
    %638 = vmatpush.msra.mxu0 %v452
    %639 = vmatpush.msra.mxu0 %v451
    %640 = vmatpush.msra.mxu0 %v450
    %641 = vmatpush.msra.mxu0 %v449
    %642 = vmatpush.msra.mxu0 %v448
    %643 = vmatpush.msra.mxu0 %v447
    %644 = vmatpush.msra.mxu0 %v446
    %645 = vmatpush.msra.mxu0 %v445
    %646 = vmatpush.msra.mxu0 %v444
    %647 = vmatpush.msra.mxu0 %v443
    %648 = vmatpush.msra.mxu0 %v442
    %649 = vmatpush.msra.mxu0 %v441
    %650 = vmatpush.msra.mxu0 %v440
    %651 = vmatpush.msra.mxu0 %v439
    %652 = vmatpush.msra.mxu0 %v438
    %653 = vmatmul.f32.gmra.mxu0 %v636
    %v654 = vpop.f32.mrf.mxu0
    %v655 = vadd.f32 0.0, %v654
    %656 = vdwg.mxu0
    %v657 = vadd.f32 %v633, %v487
    %v658 = vlog2.pop %v655
    %v659 = vmul.f32 %v658, 0.6931472
    %v660 = vadd.f32 %v657, %v659
    %v661 = vadd.f32 %v660, %v629
    %v662 = vmax.f32 %v661, -1e+30
    %vm663 = vcmp.gt.f32.partialorder %v631, 0.0
    %v664 = vsel %vm663, 1, 0
    %665 = vset.pattern.permute.xlu0 0
    %666 = vperm.xlu0 %665, %v664
    %v667 = vpop.permute.xlu0 %666
    %vm668 = vcmp.eq.s32.totalorder %v667, 1
    %v669 = vsel %vm668, %v662, %v627
    %s670 = scalar_lea.vmem [#allocation2], 48
    %v671 = vld [vmem:[%s670] sm:$0xff]
    %s672 = scalar_lea.vmem %s9, 48
    %v673 = vld [vmem:[%s672] sm:$0xff]
    %674 = vmax.xlane.f32.xlu0 %v669
    %v675 = vpop.xlane.xlu0 %674
    %v676 = vsub.f32 %v669, %v675
    %v677 = vmul.f32 %v676, 1.442695
    %v678 = vpow.pop %v677
    %679 = vmatpush.msra.mxu0 %v453
    %680 = vmatpush.msra.mxu0 %v452
    %681 = vmatpush.msra.mxu0 %v451
    %682 = vmatpush.msra.mxu0 %v450
    %683 = vmatpush.msra.mxu0 %v449
    %684 = vmatpush.msra.mxu0 %v448
    %685 = vmatpush.msra.mxu0 %v447
    %686 = vmatpush.msra.mxu0 %v446
    %687 = vmatpush.msra.mxu0 %v445
    %688 = vmatpush.msra.mxu0 %v444
    %689 = vmatpush.msra.mxu0 %v443
    %690 = vmatpush.msra.mxu0 %v442
    %691 = vmatpush.msra.mxu0 %v441
    %692 = vmatpush.msra.mxu0 %v440
    %693 = vmatpush.msra.mxu0 %v439
    %694 = vmatpush.msra.mxu0 %v438
    %695 = vmatmul.f32.gmra.mxu0 %v678
    %v696 = vpop.f32.mrf.mxu0
    %v697 = vadd.f32 0.0, %v696
    %698 = vdwg.mxu0
    %v699 = vadd.f32 %v675, %v487
    %v700 = vlog2.pop %v697
    %v701 = vmul.f32 %v700, 0.6931472
    %v702 = vadd.f32 %v699, %v701
    %v703 = vadd.f32 %v702, %v671
    %v704 = vmax.f32 %v703, -1e+30
    %vm705 = vcmp.gt.f32.partialorder %v673, 0.0
    %v706 = vsel %vm705, 1, 0
    %707 = vset.pattern.permute.xlu0 0
    %708 = vperm.xlu0 %707, %v706
    %v709 = vpop.permute.xlu0 %708
    %vm710 = vcmp.eq.s32.totalorder %v709, 1
    %v711 = vsel %vm710, %v704, %v669
    %s712 = scalar_lea.vmem [#allocation2], 56
    %v713 = vld [vmem:[%s712] sm:$0xff]
    %s714 = scalar_lea.vmem %s9, 56
    %v715 = vld [vmem:[%s714] sm:$0xff]
    %716 = vmax.xlane.f32.xlu0 %v711
    %v717 = vpop.xlane.xlu0 %716
    %v718 = vsub.f32 %v711, %v717
    %v719 = vmul.f32 %v718, 1.442695
    %v720 = vpow.pop %v719
    %721 = vmatpush.msra.mxu0 %v453
    %722 = vmatpush.msra.mxu0 %v452
    %723 = vmatpush.msra.mxu0 %v451
    %724 = vmatpush.msra.mxu0 %v450
    %725 = vmatpush.msra.mxu0 %v449
    %726 = vmatpush.msra.mxu0 %v448
    %727 = vmatpush.msra.mxu0 %v447
    %728 = vmatpush.msra.mxu0 %v446
    %729 = vmatpush.msra.mxu0 %v445
    %730 = vmatpush.msra.mxu0 %v444
    %731 = vmatpush.msra.mxu0 %v443
    %732 = vmatpush.msra.mxu0 %v442
    %733 = vmatpush.msra.mxu0 %v441
    %734 = vmatpush.msra.mxu0 %v440
    %735 = vmatpush.msra.mxu0 %v439
    %736 = vmatpush.msra.mxu0 %v438
    %737 = vmatmul.f32.gmra.mxu0 %v720
    %v738 = vpop.f32.mrf.mxu0
    %v739 = vadd.f32 0.0, %v738
    %740 = vdwg.mxu0
    %v741 = vadd.f32 %v717, %v487
    %v742 = vlog2.pop %v739
    %v743 = vmul.f32 %v742, 0.6931472
    %v744 = vadd.f32 %v741, %v743
    %v745 = vadd.f32 %v744, %v713
    %v746 = vmax.f32 %v745, -1e+30
    %vm747 = vcmp.gt.f32.partialorder %v715, 0.0
    %v748 = vsel %vm747, 1, 0
    %749 = vset.pattern.permute.xlu0 0
    %750 = vperm.xlu0 %749, %v748
    %v751 = vpop.permute.xlu0 %750
    %vm752 = vcmp.eq.s32.totalorder %v751, 1
    %v753 = vsel %vm752, %v746, %v711
    %v754 = vadd.f32 %v753, %v418
    %755 = vmax.xlane.f32.xlu0 %v754
    %v756 = vpop.xlane.xlu0 %755
    %v757 = vsub.f32 %v754, %v756
    %v758 = vmul.f32 %v757, 1.442695
    %v759 = vpow.pop %v758
    %760 = vadd.xlane.f32.xlu0 %v759
    %v761 = vpop.xlane.xlu0 %760
    %v762 = vlog2.pop %v761
    %v763 = vmul.f32 %v762, 0.6931472
    %v764 = vadd.f32 %v756, %v763
    %v765 = vmul.f32 %v764, %v151
    %v766 = vadd.f32 %v765, 0.0
    %vm767 = vcmask 7168
    %v768 = vsel %vm767, %v766, 0.0
    %v769 = vrot.slane %v768, 4
    %v770 = vadd.f32 %v768, %v769
    %v771 = vrot.slane %v770, 2
    %v772 = vadd.f32 %v770, %v771
    %v773 = vrot.slane %v772, 1
    %v774 = vadd.f32 %v772, %v773
    %v775 = vsub.f32 %v774, %v437
    %vm776 = vcmask 0
    %777 = vst.msk [vmem:[#allocation3] sm:$0x1] %vm776, %v775
    // Predicated region
    $region50: #{model_forward.1} parent=1 // pred_check
      _
    $region51: #{model_forward.1} parent=1 // pred_check_branch
      %779 = sbr.rel (0) target = $region53
    $region52: #{model_forward.1} parent=1 // pred_region
      %781 = vsyncadd [#allocation4], 0
      %s783 = sshll.u32 [#allocation3], 4
      %s784 = int_to_ptr.vmem [resolvable:$true] %s783
      %s785 = sshll.u32 %s12, 4
      %s786 = int_to_ptr.hbm [resolvable:$true] %s785
      %788 = dma.vmem_to_hbm [thread:$0]  %s784, 16, %s786, [#allocation4]
    $region53: #{model_forward.1} parent=1 // pred_fallthru
      _
    // Predicated region
    $region54: #{model_forward.1} parent=1 // pred_check
      _
    $region55: #{model_forward.1} parent=1 // pred_check_branch
      %790 = sbr.rel (0) target = $region57
    $region56: #{model_forward.1} parent=1 // pred_region
      %792 = dma.done [#allocation4], 16
    $region57: #{model_forward.1} parent=1 // pred_fallthru
      _
    %793 = vsyncpa [#allocation4], 1

</llo_original>
